<compile_context>
chip_gen: v7x
topology: tpu7x:2x2x1
jax: 0.10.0
libtpu: 0.0.40
codegen_flags: <defaults>
</compile_context>

<pallas_src>
import functools

import jax
import jax.numpy as jnp
from jax.experimental import pallas as pl
from jax.experimental.pallas import tpu as pltpu


def _weighted_sum_kernel(x_ref, w_ref, o_ref):
    # x_ref: (n_tile, S, d_tile) f32 VMEM ; w_ref: (S,) f32 SMEM ; o_ref: (n_tile, d_tile)
    s_total = x_ref.shape[1]
    acc = x_ref[:, 0, :] * w_ref[0]
    for s in range(1, s_total):          # statically unrolled VPU FMA chain
        acc = acc + x_ref[:, s, :] * w_ref[s]
    o_ref[...] = acc


def _dual_weighted_sum_kernel(x_ref, w_ref, o0_ref, o1_ref):
    # Two weight rows -> two weighted sums from a SINGLE pass over x (one HBM read).
    # x_ref: (n_tile, S, d_tile) ; w_ref: (2, S) SMEM ; o*_ref: (n_tile, d_tile)
    s_total = x_ref.shape[1]
    xs = x_ref[:, 0, :]
    acc0 = xs * w_ref[0, 0]
    acc1 = xs * w_ref[1, 0]
    for s in range(1, s_total):
        xs = x_ref[:, s, :]
        acc0 = acc0 + xs * w_ref[0, s]
        acc1 = acc1 + xs * w_ref[1, s]
    o0_ref[...] = acc0
    o1_ref[...] = acc1


def _choose_tile(dim, target, quantum):
    """Largest tile <= target that is the full dim or a multiple of `quantum`
    evenly dividing `dim` (falls back to the full dim if none exists)."""
    if dim <= target:
        return dim
    t = (target // quantum) * quantum
    while t >= quantum:
        if dim % t == 0:
            return t
        t -= quantum
    return dim


def _run_weighted_sum(x, w_rows, *, n_tile, d_tile):
    """w_rows: (K, S) f32 with K in {1, 2}.  Returns a K-tuple of (N, D) arrays,
    out_k[n, d] = sum_s w_rows[k, s] * x[n, s, d], computed in one pass over x."""
    N, S, D = x.shape
    K = w_rows.shape[0]
    grid = (N // n_tile, D // d_tile)

    if K == 1:
        kernel = _weighted_sum_kernel
        w_arg = w_rows[0]
        out_shape = jax.ShapeDtypeStruct((N, D), jnp.float32)
        out_specs = pl.BlockSpec((n_tile, d_tile), lambda i, j: (i, j))
    else:
        kernel = _dual_weighted_sum_kernel
        w_arg = w_rows
        out_shape = tuple(jax.ShapeDtypeStruct((N, D), jnp.float32) for _ in range(K))
        out_specs = [pl.BlockSpec((n_tile, d_tile), lambda i, j: (i, j))
                     for _ in range(K)]

    # explicit VMEM budget: double-buffered x block + double-buffered output block(s)
    x_block_bytes = n_tile * S * d_tile * 4
    o_block_bytes = K * n_tile * d_tile * 4
    vmem_needed = 2 * x_block_bytes + 2 * o_block_bytes + (2 << 20)
    vmem_limit = int(min(max(vmem_needed, 32 << 20), 64 << 20))  # 64 MiB cap: v7x-safe

    outs = pl.pallas_call(
        kernel,
        out_shape=out_shape,
        grid_spec=pltpu.PrefetchScalarGridSpec(
            num_scalar_prefetch=0,
            grid=grid,
            in_specs=[
                pl.BlockSpec((n_tile, S, d_tile), lambda i, j: (i, 0, j)),
                pl.BlockSpec(memory_space=pltpu.MemorySpace.SMEM),  # whole w in SMEM
            ],
            out_specs=out_specs,
        ),
        compiler_params=pltpu.CompilerParams(
            dimension_semantics=("parallel", "parallel"),
            vmem_limit_bytes=vmem_limit,
        ),
    )(x, w_arg)
    return (outs,) if K == 1 else tuple(outs)


def coarse_adapter_forward(x, lambdas, residual_indices, ablation="sum",
                           n_tile_target=256, d_tile_target=1024,
                           x_block_budget_bytes=8 << 20):
    """x: (N, S, D) float; lambdas: (R,) float; residual_indices: (R,) int."""
    N, S, D = x.shape
    x = x.astype(jnp.float32)
    lambdas = lambdas.astype(jnp.float32)

    # ---- per-subspace weight vectors (cheap JAX glue) ----
    mask = jnp.zeros((S,), jnp.bool_).at[residual_indices].set(True)
    # residual weights: scatter-ADD so duplicated indices would accumulate like the einsum
    w_res = jnp.zeros((S,), jnp.float32).at[residual_indices].add(lambdas)
    # indicator of the non-residual (ablated) subspaces
    w_abl = jnp.where(mask, 0.0, 1.0).astype(jnp.float32)

    # ---- tile selection: lane-dense d tile first, then budget-limited n tile ----
    d_tile = _choose_tile(D, d_tile_target, 128)
    n_budget = max(8, (x_block_budget_bytes // (S * d_tile * 4)) // 8 * 8)
    n_tile = _choose_tile(N, min(n_tile_target, n_budget), 8)

    if ablation in (None, "sum"):
        (out,) = _run_weighted_sum(x, (w_res + w_abl)[None, :],
                                   n_tile=n_tile, d_tile=d_tile)
        return out
    elif ablation == "zero":
        (out,) = _run_weighted_sum(x, w_res[None, :], n_tile=n_tile, d_tile=d_tile)
        return out
    elif ablation == "mean":
        # Fused: one pass over x yields both terms; batch-mean + broadcast-add is O(N*D).
        res, abl = _run_weighted_sum(x, jnp.stack([w_res, w_abl], axis=0),
                                     n_tile=n_tile, d_tile=d_tile)
        return res + jnp.mean(abl, axis=0, keepdims=True)
    else:
        raise ValueError(f"Invalid ablation: {ablation!r}")


def _reference_forward(x, lambdas, residual_indices, n_subspaces, ablation="sum"):
    # Pure-JAX mirror of the PyTorch forward for validation.
    adapted = jnp.einsum("nrd,r->nd", x[:, residual_indices, :], lambdas)
    mask = jnp.zeros((n_subspaces,), bool).at[residual_indices].set(True)
    ablated = x[:, ~mask, :]
    if ablation in (None, "sum"):
        adapted = adapted + ablated.sum(axis=1)
    elif ablation == "mean":
        adapted = adapted + ablated.mean(axis=0, keepdims=True).sum(axis=1)
    elif ablation == "zero":
        pass
    return adapted


if __name__ == "__main__":
    key = jax.random.PRNGKey(0)

    # ---- small, module-consistent demo: batch N=2, n_subspaces S=8, feature D=256 ----
    N, S, D = 2, 8, 256
    residual_indices = jnp.array([1, 3, 6], dtype=jnp.int32)  # R = 3
    kx, kl, kx2 = jax.random.split(key, 3)
    x = jax.random.normal(kx, (N, S, D), dtype=jnp.float32)
    # lambda_init='randn' => randn(R) + 1, deterministic via PRNGKey(0)
    lambdas = jax.random.normal(kl, (residual_indices.shape[0],), dtype=jnp.float32) + 1.0

    for ablation in ("sum", "zero", "mean"):
        fwd = jax.jit(functools.partial(coarse_adapter_forward,
                                        residual_indices=residual_indices,
                                        ablation=ablation))
        out = jax.block_until_ready(fwd(x, lambdas))
        ref = _reference_forward(x, lambdas, residual_indices, S, ablation=ablation)
        assert out.shape == (N, D), out.shape
        assert jnp.allclose(out, ref, atol=1e-5, rtol=1e-5), (
            ablation, float(jnp.max(jnp.abs(out - ref))))

    # ---- larger shape to exercise the multi-block (tiled N and D) path ----
    N2, D2 = 512, 1024
    x2 = jax.random.normal(kx2, (N2, S, D2), dtype=jnp.float32)
    for ablation in ("sum", "mean"):
        fwd2 = jax.jit(functools.partial(coarse_adapter_forward,
                                         residual_indices=residual_indices,
                                         ablation=ablation))
        out2 = jax.block_until_ready(fwd2(x2, lambdas))
        ref2 = _reference_forward(x2, lambdas, residual_indices, S, ablation=ablation)
        assert out2.shape == (N2, D2), out2.shape
        assert jnp.allclose(out2, ref2, atol=1e-4, rtol=1e-5), (
            ablation, float(jnp.max(jnp.abs(out2 - ref2))))

    print("KERNEL_OK")
</pallas_src>

<mosaic_0001>
module attributes {stable_mosaic.version = 11 : i64} {
  func.func @_weighted_sum_kernel(%arg0: i32, %arg1: i32, %arg2: memref<2x8x256xf32, #tpu.memory_space<vmem>>, %arg3: memref<8xf32, #tpu.memory_space<smem>>, %arg4: memref<2x256xf32, #tpu.memory_space<vmem>>) attributes {dimension_semantics = [#tpu.dimension_semantics<parallel>, #tpu.dimension_semantics<parallel>], iteration_bounds = array<i64: 1, 1>, scalar_prefetch = 0 : i64, scratch_operands = 0 : i64, tpu.core_type = #tpu.core_type<tc>, window_params = [{transform_indices = @transform_0, window_bounds = array<i64: 2, 8, 256>}, {transform_indices = @transform_1, window_bounds = array<i64: 8>}, {transform_indices = @transform_2, window_bounds = array<i64: 2, 256>}]} {
    %c0 = arith.constant 0 : index
    %c0_0 = arith.constant 0 : index
    %c0_1 = arith.constant 0 : index
    %0 = vector.load %arg2[%c0, %c0_0, %c0_1] : memref<2x8x256xf32, #tpu.memory_space<vmem>>, vector<2x1x256xf32>
    %1 = vector.shape_cast %0 : vector<2x1x256xf32> to vector<2x256xf32>
    %c0_2 = arith.constant 0 : index
    %2 = memref.load %arg3[%c0_2] : memref<8xf32, #tpu.memory_space<smem>>
    %3 = vector.broadcast %2 : f32 to vector<2x256xf32>
    %4 = arith.mulf %1, %3 : vector<2x256xf32>
    %c0_3 = arith.constant 0 : index
    %c1 = arith.constant 1 : index
    %c0_4 = arith.constant 0 : index
    %5 = vector.load %arg2[%c0_3, %c1, %c0_4] : memref<2x8x256xf32, #tpu.memory_space<vmem>>, vector<2x1x256xf32>
    %6 = vector.shape_cast %5 : vector<2x1x256xf32> to vector<2x256xf32>
    %c1_5 = arith.constant 1 : index
    %7 = memref.load %arg3[%c1_5] : memref<8xf32, #tpu.memory_space<smem>>
    %8 = vector.broadcast %7 : f32 to vector<2x256xf32>
    %9 = arith.mulf %6, %8 : vector<2x256xf32>
    %10 = arith.addf %4, %9 : vector<2x256xf32>
    %c0_6 = arith.constant 0 : index
    %c2 = arith.constant 2 : index
    %c0_7 = arith.constant 0 : index
    %11 = vector.load %arg2[%c0_6, %c2, %c0_7] : memref<2x8x256xf32, #tpu.memory_space<vmem>>, vector<2x1x256xf32>
    %12 = vector.shape_cast %11 : vector<2x1x256xf32> to vector<2x256xf32>
    %c2_8 = arith.constant 2 : index
    %13 = memref.load %arg3[%c2_8] : memref<8xf32, #tpu.memory_space<smem>>
    %14 = vector.broadcast %13 : f32 to vector<2x256xf32>
    %15 = arith.mulf %12, %14 : vector<2x256xf32>
    %16 = arith.addf %10, %15 : vector<2x256xf32>
    %c0_9 = arith.constant 0 : index
    %c3 = arith.constant 3 : index
    %c0_10 = arith.constant 0 : index
    %17 = vector.load %arg2[%c0_9, %c3, %c0_10] : memref<2x8x256xf32, #tpu.memory_space<vmem>>, vector<2x1x256xf32>
    %18 = vector.shape_cast %17 : vector<2x1x256xf32> to vector<2x256xf32>
    %c3_11 = arith.constant 3 : index
    %19 = memref.load %arg3[%c3_11] : memref<8xf32, #tpu.memory_space<smem>>
    %20 = vector.broadcast %19 : f32 to vector<2x256xf32>
    %21 = arith.mulf %18, %20 : vector<2x256xf32>
    %22 = arith.addf %16, %21 : vector<2x256xf32>
    %c0_12 = arith.constant 0 : index
    %c4 = arith.constant 4 : index
    %c0_13 = arith.constant 0 : index
    %23 = vector.load %arg2[%c0_12, %c4, %c0_13] : memref<2x8x256xf32, #tpu.memory_space<vmem>>, vector<2x1x256xf32>
    %24 = vector.shape_cast %23 : vector<2x1x256xf32> to vector<2x256xf32>
    %c4_14 = arith.constant 4 : index
    %25 = memref.load %arg3[%c4_14] : memref<8xf32, #tpu.memory_space<smem>>
    %26 = vector.broadcast %25 : f32 to vector<2x256xf32>
    %27 = arith.mulf %24, %26 : vector<2x256xf32>
    %28 = arith.addf %22, %27 : vector<2x256xf32>
    %c0_15 = arith.constant 0 : index
    %c5 = arith.constant 5 : index
    %c0_16 = arith.constant 0 : index
    %29 = vector.load %arg2[%c0_15, %c5, %c0_16] : memref<2x8x256xf32, #tpu.memory_space<vmem>>, vector<2x1x256xf32>
    %30 = vector.shape_cast %29 : vector<2x1x256xf32> to vector<2x256xf32>
    %c5_17 = arith.constant 5 : index
    %31 = memref.load %arg3[%c5_17] : memref<8xf32, #tpu.memory_space<smem>>
    %32 = vector.broadcast %31 : f32 to vector<2x256xf32>
    %33 = arith.mulf %30, %32 : vector<2x256xf32>
    %34 = arith.addf %28, %33 : vector<2x256xf32>
    %c0_18 = arith.constant 0 : index
    %c6 = arith.constant 6 : index
    %c0_19 = arith.constant 0 : index
    %35 = vector.load %arg2[%c0_18, %c6, %c0_19] : memref<2x8x256xf32, #tpu.memory_space<vmem>>, vector<2x1x256xf32>
    %36 = vector.shape_cast %35 : vector<2x1x256xf32> to vector<2x256xf32>
    %c6_20 = arith.constant 6 : index
    %37 = memref.load %arg3[%c6_20] : memref<8xf32, #tpu.memory_space<smem>>
    %38 = vector.broadcast %37 : f32 to vector<2x256xf32>
    %39 = arith.mulf %36, %38 : vector<2x256xf32>
    %40 = arith.addf %34, %39 : vector<2x256xf32>
    %c0_21 = arith.constant 0 : index
    %c7 = arith.constant 7 : index
    %c0_22 = arith.constant 0 : index
    %41 = vector.load %arg2[%c0_21, %c7, %c0_22] : memref<2x8x256xf32, #tpu.memory_space<vmem>>, vector<2x1x256xf32>
    %42 = vector.shape_cast %41 : vector<2x1x256xf32> to vector<2x256xf32>
    %c7_23 = arith.constant 7 : index
    %43 = memref.load %arg3[%c7_23] : memref<8xf32, #tpu.memory_space<smem>>
    %44 = vector.broadcast %43 : f32 to vector<2x256xf32>
    %45 = arith.mulf %42, %44 : vector<2x256xf32>
    %46 = arith.addf %40, %45 : vector<2x256xf32>
    %c0_24 = arith.constant 0 : index
    %c0_25 = arith.constant 0 : index
    %47 = vector.load %arg4[%c0_24, %c0_25] : memref<2x256xf32, #tpu.memory_space<vmem>>, vector<2x256xf32>
    tpu.vector_store %arg4[%c0_24, %c0_25], %46 {strides = array<i32>} : memref<2x256xf32, #tpu.memory_space<vmem>>, vector<2x256xf32>,
    return
  }
  func.func @transform_0(%arg0: i32, %arg1: i32) -> (i32, i32, i32) {
    %c0_i32 = arith.constant 0 : i32
    %c0_i32_0 = arith.constant 0 : i32
    return %arg0, %c0_i32, %arg1 : i32, i32, i32
  }
  func.func @transform_1(%arg0: i32, %arg1: i32) -> i32 {
    %c0_i32 = arith.constant 0 : i32
    %c0_i32_0 = arith.constant 0 : i32
    return %c0_i32 : i32
  }
  func.func @transform_2(%arg0: i32, %arg1: i32) -> (i32, i32) {
    %c0_i32 = arith.constant 0 : i32
    return %arg0, %arg1 : i32, i32
  }
}

</mosaic_0001>

<llo_original>
// kernel: coarse_adapter_forward.1
$region0: #{coarse_adapter_forward.1}
  #allocation0 [shape = 'u32[]', space=smem, size = 0x4, offset = 0x4, fixed_abs, tag = 'smem constant byte address 0x4 - core index']
  #allocation1 [shape = 'u32[144,128]{1,0:T(1,128)}', space=vmem, size = 0x12000, scoped, tag = 'internal scratch']
  %s0 = inlined_call_operand.vmem [shape: f32[2,8,256], index: 0, kind: input, shape index: {}]
  %s1 = inlined_call_operand.vmem [shape: f32[8], index: 1, kind: input, shape index: {}]
  %s2 = inlined_call_operand.hbm [shape: f32[2,256], index: 2, kind: output, shape index: {}]
  %s3 = sld [smem:[#allocation0]]
  $region22: #{coarse_adapter_forward.1} parent=0
    _
  %s5 = ssub.s32 1, %s3
  %s6 = scalar_select 0, %s5, %s3
  $region1: #{coarse_adapter_forward.1} parent=0
    #allocation2 [shape = 'u8[512]{0}', space=smem, size = 0x200, scoped, tag = 'input window, operand 1, single buffered']
    #allocation3 [shape = 's32[1]{0}', space=sflag, size = 0x4, scoped, tag = 'scoped memory for coarse_adapter_forward.1']
    #allocation4 [shape = 's32[1]{0}', space=sflag, size = 0x4, scoped, tag = 'scoped memory for coarse_adapter_forward.1']
    #allocation5 [shape = 'u8[2048]{0}', space=vmem, size = 0x800, scoped, tag = 'output window, operand 0, single buffered']
    %7 = vsyncpa [#allocation4], 0
    %8 = vsyncpa [#allocation3], 0
    // Predicated region
    $region2: #{coarse_adapter_forward.1} parent=1 // pred_check
      _
    $region3: #{coarse_adapter_forward.1} parent=1 // pred_check_branch
      %10 = sbr.rel (0) target = $region5
    $region4: #{coarse_adapter_forward.1} parent=1 // pred_region
      _
    $region5: #{coarse_adapter_forward.1} parent=1 // pred_fallthru
      _
    // Predicated region
    $region6: #{coarse_adapter_forward.1} parent=1 // pred_check
      _
    $region7: #{coarse_adapter_forward.1} parent=1 // pred_check_branch
      %12 = sbr.rel (0) target = $region9
    $region8: #{coarse_adapter_forward.1} parent=1 // pred_region
      %s14 = ssub.s32 16, 16
      %15 = vsyncadd [#allocation4], %s14
      %s17 = sshll.u32 %s1, 4
      %s18 = int_to_ptr.vmem [resolvable:$true] %s17
      %20 = dma.vmem_to_smem %s18, 16, [#allocation2], [#allocation4]
    $region9: #{coarse_adapter_forward.1} parent=1 // pred_fallthru
      _
    // Predicated region
    $region10: #{coarse_adapter_forward.1} parent=1 // pred_check
      _
    $region11: #{coarse_adapter_forward.1} parent=1 // pred_check_branch
      %22 = sbr.rel (0) target = $region13
    $region12: #{coarse_adapter_forward.1} parent=1 // pred_region
      %23 = dma.done [#allocation4], 16
    $region13: #{coarse_adapter_forward.1} parent=1 // pred_fallthru
      _
    %24 = sfence
    %v25 = vld [vmem:[%s0] ss:$8 sm:$0x3]
    %s26 = scalar_lea.vmem %s0, 16
    %v27 = vld [vmem:[%s26] ss:$8 sm:$0x3]
    %s28 = sld [smem:[#allocation2]]
    %v29 = vstv %s28
    %v30 = vmul.f32 %v25, %v29
    %v31 = vmul.f32 %v27, %v29
    %s32 = scalar_lea.vmem %s0, 1
    %v33 = vld [vmem:[%s32] ss:$8 sm:$0x3]
    %s34 = scalar_lea.vmem %s0, 17
    %v35 = vld [vmem:[%s34] ss:$8 sm:$0x3]
    %s36 = sld [smem:[#allocation2 + $0x1]]
    %v37 = vstv %s36
    %v38 = vmul.f32 %v33, %v37
    %v39 = vmul.f32 %v35, %v37
    %v40 = vadd.f32 %v30, %v38
    %v41 = vadd.f32 %v31, %v39
    %s42 = scalar_lea.vmem %s0, 2
    %v43 = vld [vmem:[%s42] ss:$8 sm:$0x3]
    %s44 = scalar_lea.vmem %s0, 18
    %v45 = vld [vmem:[%s44] ss:$8 sm:$0x3]
    %s46 = sld [smem:[#allocation2 + $0x2]]
    %v47 = vstv %s46
    %v48 = vmul.f32 %v43, %v47
    %v49 = vmul.f32 %v45, %v47
    %v50 = vadd.f32 %v40, %v48
    %v51 = vadd.f32 %v41, %v49
    %s52 = scalar_lea.vmem %s0, 3
    %v53 = vld [vmem:[%s52] ss:$8 sm:$0x3]
    %s54 = scalar_lea.vmem %s0, 19
    %v55 = vld [vmem:[%s54] ss:$8 sm:$0x3]
    %s56 = sld [smem:[#allocation2 + $0x3]]
    %v57 = vstv %s56
    %v58 = vmul.f32 %v53, %v57
    %v59 = vmul.f32 %v55, %v57
    %v60 = vadd.f32 %v50, %v58
    %v61 = vadd.f32 %v51, %v59
    %s62 = scalar_lea.vmem %s0, 4
    %v63 = vld [vmem:[%s62] ss:$8 sm:$0x3]
    %s64 = scalar_lea.vmem %s0, 20
    %v65 = vld [vmem:[%s64] ss:$8 sm:$0x3]
    %s66 = sld [smem:[#allocation2 + $0x4]]
    %v67 = vstv %s66
    %v68 = vmul.f32 %v63, %v67
    %v69 = vmul.f32 %v65, %v67
    %v70 = vadd.f32 %v60, %v68
    %v71 = vadd.f32 %v61, %v69
    %s72 = scalar_lea.vmem %s0, 5
    %v73 = vld [vmem:[%s72] ss:$8 sm:$0x3]
    %s74 = scalar_lea.vmem %s0, 21
    %v75 = vld [vmem:[%s74] ss:$8 sm:$0x3]
    %s76 = sld [smem:[#allocation2 + $0x5]]
    %v77 = vstv %s76
    %v78 = vmul.f32 %v73, %v77
    %v79 = vmul.f32 %v75, %v77
    %v80 = vadd.f32 %v70, %v78
    %v81 = vadd.f32 %v71, %v79
    %s82 = scalar_lea.vmem %s0, 6
    %v83 = vld [vmem:[%s82] ss:$8 sm:$0x3]
    %s84 = scalar_lea.vmem %s0, 22
    %v85 = vld [vmem:[%s84] ss:$8 sm:$0x3]
    %s86 = sld [smem:[#allocation2 + $0x6]]
    %v87 = vstv %s86
    %v88 = vmul.f32 %v83, %v87
    %v89 = vmul.f32 %v85, %v87
    %v90 = vadd.f32 %v80, %v88
    %v91 = vadd.f32 %v81, %v89
    %s92 = scalar_lea.vmem %s0, 7
    %v93 = vld [vmem:[%s92] ss:$8 sm:$0x3]
    %s94 = scalar_lea.vmem %s0, 23
    %v95 = vld [vmem:[%s94] ss:$8 sm:$0x3]
    %s96 = sld [smem:[#allocation2 + $0x7]]
    %v97 = vstv %s96
    %v98 = vmul.f32 %v93, %v97
    %v99 = vmul.f32 %v95, %v97
    %v100 = vadd.f32 %v90, %v98
    %v101 = vadd.f32 %v91, %v99
    %v104 = vcombine.low %v100, %v101
    %v106 = vunpack.c.l.s4 1935823168
    %v107 = vunpack.c.0.s8 %v106
    %v108 = vlaneseq
    %v109 = vshrl.u32 %v108, 7
    %v110 = vsub.s32 %v107, %v109
    %v111 = vrot.slane %v104, %v110
    %113 = vst [vmem:[#allocation5] sm:$0xf] %v111
    // Predicated region
    $region14: #{coarse_adapter_forward.1} parent=1 // pred_check
      _
    $region15: #{coarse_adapter_forward.1} parent=1 // pred_check_branch
      %115 = sbr.rel (0) target = $region17
    $region16: #{coarse_adapter_forward.1} parent=1 // pred_region
      %s117 = ssub.s32 64, 64
      %118 = vsyncadd [#allocation3], %s117
      %s120 = sshll.u32 [#allocation5], 4
      %s121 = int_to_ptr.vmem [resolvable:$true] %s120
      %123 = dma.vmem_to_hbm [thread:$0]  %s121, 64, %s2, [#allocation3]
    $region17: #{coarse_adapter_forward.1} parent=1 // pred_fallthru
      _
    // Predicated region
    $region18: #{coarse_adapter_forward.1} parent=1 // pred_check
      _
    $region19: #{coarse_adapter_forward.1} parent=1 // pred_check_branch
      %125 = sbr.rel (0) target = $region21
    $region20: #{coarse_adapter_forward.1} parent=1 // pred_region
      %126 = dma.done [#allocation3], 64
    $region21: #{coarse_adapter_forward.1} parent=1 // pred_fallthru
      _
    %127 = vsyncpa [#allocation3], 1
    %128 = vsyncpa [#allocation4], 1

</llo_original>
